<compile_context>
chip_gen: v5e
topology: v5e:2x2
jax: 0.10.0
libtpu: 0.0.40
codegen_flags: <defaults>
</compile_context>

<pallas_src>
import math

import numpy as np
import jax
import jax.numpy as jnp
from jax import lax
from jax.experimental import pallas as pl
from jax.experimental.pallas import tpu as pltpu


_GEOM_OPS = ("ShearX", "ShearY", "TranslateX", "TranslateY", "Rotate")
_EQ_BINS = 256


# ----------------------------------------------------------------------------
# host-side (numpy, trace-time static) helpers
# ----------------------------------------------------------------------------
def _get_inverse_affine_matrix(center, angle, translate, scale, shear):
    # same math as torchvision.transforms.functional._get_inverse_affine_matrix
    rot = math.radians(angle)
    sx = math.radians(shear[0])
    sy = math.radians(shear[1])
    cx, cy = center
    tx, ty = translate
    a = math.cos(rot - sy) / math.cos(sy)
    b = -math.cos(rot - sy) * math.tan(sx) / math.cos(sy) - math.sin(rot)
    c = math.sin(rot - sy) / math.cos(sy)
    d = -math.sin(rot - sy) * math.tan(sx) / math.cos(sy) + math.cos(rot)
    m = [d, -b, 0.0, -c, a, 0.0]
    m = [v / scale for v in m]
    m[2] += m[0] * (-cx - tx) + m[1] * (-cy - ty)
    m[5] += m[3] * (-cx - tx) + m[4] * (-cy - ty)
    m[2] += cx
    m[5] += cy
    return m


def _matrix_for_op(op_name, magnitude):
    zc = [0.0, 0.0]
    if op_name == "ShearX":
        return _get_inverse_affine_matrix(zc, 0.0, [0.0, 0.0], 1.0,
                                          [math.degrees(magnitude), 0.0])
    if op_name == "ShearY":
        return _get_inverse_affine_matrix(zc, 0.0, [0.0, 0.0], 1.0,
                                          [0.0, math.degrees(magnitude)])
    if op_name == "TranslateX":
        return _get_inverse_affine_matrix(zc, 0.0, [float(int(magnitude)), 0.0],
                                          1.0, [0.0, 0.0])
    if op_name == "TranslateY":
        return _get_inverse_affine_matrix(zc, 0.0, [0.0, float(int(magnitude))],
                                          1.0, [0.0, 0.0])
    if op_name == "Rotate":
        # F.rotate builds the inverse matrix with -angle
        return _get_inverse_affine_matrix(zc, -magnitude, [0.0, 0.0], 1.0, [0.0, 0.0])
    raise ValueError(op_name)


def _geom_tables(op_name, magnitude, H, W):
    """Static nearest-neighbour inverse-affine source map.

    Returns delta[1, HW] float32 (flat-index shift per output pixel, sentinel HW for
    out-of-bounds sources) and the sorted list of unique valid shifts.
    NOTE: nearest rounding uses np.round (ties-to-even); boundary/tie pixels can differ
    by one from torchvision's grid_sample(nearest) backend.
    """
    m = _matrix_for_op(op_name, magnitude)
    HW = H * W
    assert HW < 2 ** 24  # integer deltas must compare exactly in float32
    p = np.arange(HW)
    iy = p // W
    ix = p - iy * W
    cxp = (W - 1) * 0.5
    cyp = (H - 1) * 0.5
    bx = ix - cxp
    by = iy - cyp
    xs = m[0] * bx + m[1] * by + m[2] + cxp
    ys = m[3] * bx + m[4] * by + m[5] + cyp
    xr = np.round(xs)
    yr = np.round(ys)
    valid = (xr >= 0.0) & (xr <= W - 1.0) & (yr >= 0.0) & (yr <= H - 1.0)
    src = (yr * W + xr).astype(np.int64)
    # sentinel HW can never equal a real shift (|shift| <= HW - 1)
    delta = np.where(valid, src - p, HW).astype(np.int64)
    uniq = sorted({int(d) for d in delta[valid]})
    return delta.astype(np.float32)[None, :], uniq


def _interior_mask(H, W):
    """Batch-invariant interior mask for the Sharpness 3x3 blur (1 = interior pixel)."""
    p = np.arange(H * W)
    iy = p // W
    ix = p - iy * W
    inner = (ix >= 1) & (ix <= W - 2) & (iy >= 1) & (iy <= H - 2)
    return inner.astype(np.float32)[None, :]


def _pick_eq_chunk(HW, target=2048):
    """Lane-chunk size for Equalize so the (256, chunk) intermediates stay ~2 MB."""
    if HW <= target:
        return HW
    for c in range(target, 127, -1):
        if HW % c == 0:
            return c
    # TODO(synk): ragged tail handling for HW with no divisor in [128, target]
    return HW


def _choose_images_per_block(N, C, HW):
    """Pack several images' channel rows into one block.

    Keeps f32 vregs (8 sublanes) and u8 I/O tiles well filled while bounding the per-block
    f32 working set, and leaves >= 2 grid steps for megacore sharding when the batch allows.
    """
    max_rows = max(8, min(64, (2 << 20) // max(1, 4 * HW)))
    best = N  # whole-batch block (block_shape == full array dims) is always legal
    for ipb in range(1, N):
        rows = ipb * C
        if N % ipb == 0 and rows % 8 == 0 and rows <= max_rows:
            best = ipb
    # TODO(synk): when N*C is large and C does not tile to multiples of 8, pad the row
    # axis instead of falling back to a single whole-batch block.
    return best


def _vmem_limit_bytes(rows_pb, HW, eq_chunk, n_aux):
    f32_block = rows_pb * HW * 4
    u8_block = rows_pb * HW
    eq_scratch = 3 * _EQ_BINS * eq_chunk * 4
    aux_bytes = n_aux * HW * 4
    est = 10 * f32_block + 4 * u8_block + eq_scratch + 2 * aux_bytes
    # explicit, generous budget; capped with headroom below v7x's 64 MiB physical VMEM
    return int(min(60 * 2 ** 20, max(32 * 2 ** 20, 2 * est)))


# ----------------------------------------------------------------------------
# in-kernel op bodies (traced jnp on the (rows, HW) float32 tile)
# ----------------------------------------------------------------------------
def _blend(img1, img2, ratio):
    # torchvision _blend on uint8: clamp(ratio*img1 + (1-ratio)*img2, 0, 255).to(uint8)
    return jnp.floor(jnp.clip(ratio * img1 + (1.0 - ratio) * img2, 0.0, 255.0))


def _grayscale(img, C):
    # torchvision rgb_to_grayscale, truncated back to the uint8 grid
    if C == 3:
        g = 0.2989 * img[0:1] + 0.587 * img[1:2] + 0.114 * img[2:3]
        return jnp.floor(jnp.clip(g, 0.0, 255.0))
    return img


def _apply_geometric(x, delta_ref, unique_deltas, HW):
    """Nearest inverse-affine warp: one XLU roll + one masked select per unique shift."""
    delta = delta_ref[...]                 # (1, HW) f32; out-of-bounds pixels hold HW
    out = jnp.zeros_like(x)                # fill value 0 (fill=None path)
    # TODO(synk): for large rotations (hundreds of unique shifts) switch to a dy-grouped /
    # banded-MXU gather instead of this fully-unrolled roll+select loop.
    for d in unique_deltas:
        nbr = x if d == 0 else pltpu.roll(x, shift=(-d) % HW, axis=1)
        out = jnp.where(delta == float(d), nbr, out)   # exact: |d| < 2^24
    return out


def _apply_sharpness(x, interior_ref, magnitude, H, W):
    HW = H * W
    kw = ((1.0, 1.0, 1.0), (1.0, 5.0, 1.0), (1.0, 1.0, 1.0))
    acc = jnp.zeros_like(x)
    for dy in (-1, 0, 1):
        for dx in (-1, 0, 1):
            wgt = kw[dy + 1][dx + 1] / 13.0
            shift = dy * W + dx
            nbr = x if shift == 0 else pltpu.roll(x, shift=(-shift) % HW, axis=1)
            acc = acc + wgt * nbr
    blur = jnp.round(acc)                               # torchvision rounds before u8 cast
    blurred = jnp.where(interior_ref[...] > 0.5, blur, x)   # host-precomputed mask
    return _blend(x, blurred, 1.0 + magnitude)


def _equalize(x, HW, chunk):
    """torchvision F.equalize per row (= per channel), chunked over the lane axis."""
    rows = x.shape[0]
    n_chunks = HW // chunk
    vals = lax.broadcasted_iota(jnp.int32, (_EQ_BINS, chunk), 0).astype(jnp.float32)
    idx_col = lax.broadcasted_iota(jnp.int32, (_EQ_BINS, 1), 0).astype(jnp.float32)
    ridx = lax.broadcasted_iota(jnp.int32, (_EQ_BINS, _EQ_BINS), 0)
    cidx = lax.broadcasted_iota(jnp.int32, (_EQ_BINS, _EQ_BINS), 1)

    out_rows = []
    for r in range(rows):
        row = x[r:r + 1, :]
        # pass 1 (chunked): cumulative histogram cum[v] = #{p : row[p] <= v}
        cum = jnp.zeros((_EQ_BINS, 1), jnp.float32)
        for c0 in range(0, HW, chunk):
            ch = row[:, c0:c0 + chunk]
            cum = cum + jnp.sum(jnp.where(vals >= ch, 1.0, 0.0), axis=1, keepdims=True)
        cum_prev = jnp.concatenate(
            [jnp.zeros((1, 1), jnp.float32), cum[:_EQ_BINS - 1, :]], axis=0)
        hist = cum - cum_prev                                   # derived, no 2nd big pass
        nz = hist > 0.0
        last_idx = jnp.max(jnp.where(nz, idx_col, -1.0), axis=0, keepdims=True)
        last_val = jnp.sum(jnp.where(idx_col == last_idx, hist, 0.0),
                           axis=0, keepdims=True)
        step = jnp.floor((float(HW) - last_val) / 255.0)        # (1, 1)
        step_safe = jnp.where(step == 0.0, 1.0, step)
        # lut[v] = clip((cum[v-1] + step//2) // step, 0, 255); lut[0] == 0 automatically
        lut_col = jnp.clip(
            jnp.floor((cum_prev + jnp.floor(step / 2.0)) / step_safe), 0.0, 255.0)
        # (256,1) column -> (1,256) lane row via a diagonal mask (keeps the LUT in the
        # standard MXU lhs orientation without an odd-shaped transpose)
        lut_row = jnp.sum(jnp.where(ridx == cidx, lut_col, 0.0), axis=0, keepdims=True)
        lut_row = lut_row.astype(jnp.bfloat16)                  # integers <= 255: exact

        # pass 2 (chunked): LUT gather on the MXU: (1,256)bf16 @ (256,L)bf16 -> (1,L)f32
        eq_chunks = []
        for c0 in range(0, HW, chunk):
            ch = row[:, c0:c0 + chunk]
            onehot = jnp.where(vals == ch, 1.0, 0.0).astype(jnp.bfloat16)
            eq_chunks.append(jnp.dot(lut_row, onehot,
                                     preferred_element_type=jnp.float32))
        eq = eq_chunks[0] if n_chunks == 1 else jnp.concatenate(eq_chunks, axis=1)
        out_rows.append(jnp.where(step == 0.0, row, eq))
    return out_rows[0] if rows == 1 else jnp.concatenate(out_rows, axis=0)


def _apply_photometric(x, op_name, magnitude, ipb, C, H, W, eq_chunk):
    HW = H * W

    if op_name == "Identity":
        return x

    if op_name == "Brightness":
        return _blend(x, 0.0, 1.0 + magnitude)

    if op_name == "Posterize":
        bits = int(magnitude)
        keep = float(2 ** (8 - bits)) if bits < 8 else 1.0
        return jnp.floor(x / keep) * keep

    if op_name == "Solarize":
        return jnp.where(x >= magnitude, 255.0 - x, x)

    if op_name == "AutoContrast":
        mn = jnp.min(x, axis=1, keepdims=True)
        mx = jnp.max(x, axis=1, keepdims=True)
        degenerate = mx == mn
        denom = jnp.where(degenerate, 1.0, mx - mn)
        scale = jnp.where(degenerate, 1.0, 255.0 / denom)
        mn2 = jnp.where(degenerate, 0.0, mn)
        return jnp.floor(jnp.clip((x - mn2) * scale, 0.0, 255.0))

    if op_name == "Equalize":
        return _equalize(x, HW, eq_chunk)

    if op_name == "Color":
        groups = []
        for i in range(ipb):                     # static per-image row-group slices
            xi = x[i * C:(i + 1) * C, :]
            groups.append(_blend(xi, _grayscale(xi, C), 1.0 + magnitude))
        return groups[0] if ipb == 1 else jnp.concatenate(groups, axis=0)

    if op_name == "Contrast":
        groups = []
        for i in range(ipb):
            xi = x[i * C:(i + 1) * C, :]
            g = _grayscale(xi, C)
            mean = jnp.sum(jnp.sum(g, axis=1, keepdims=True), axis=0, keepdims=True)
            mean = mean / float(g.shape[0] * g.shape[1])
            groups.append(_blend(xi, mean, 1.0 + magnitude))
        return groups[0] if ipb == 1 else jnp.concatenate(groups, axis=0)

    raise ValueError(f"unhandled op {op_name}")


# ----------------------------------------------------------------------------
# fused kernel + pallas_call wrapper
# ----------------------------------------------------------------------------
def _make_fused_kernel(op_plan, ipb, C, H, W, eq_chunk):
    HW = H * W

    def kernel(*refs):
        img_ref = refs[0]
        out_ref = refs[-1]
        aux_refs = refs[1:-1]
        # u8 -> f32 via an i32 hop (known-good Mosaic lowering; values are exact ints)
        x = img_ref[...].astype(jnp.int32).astype(jnp.float32)    # (ipb*C, HW)
        for kind, payload in op_plan:
            if kind == "geom":
                aux_idx, uniq = payload
                x = _apply_geometric(x, aux_refs[aux_idx], uniq, HW)
            elif kind == "sharp":
                aux_idx, magnitude = payload
                x = _apply_sharpness(x, aux_refs[aux_idx], magnitude, H, W)
            else:
                op_name, magnitude = payload
                x = _apply_photometric(x, op_name, magnitude, ipb, C, H, W, eq_chunk)
        y = jnp.clip(x, 0.0, 255.0)
        out_ref[...] = y.astype(jnp.int32).astype(jnp.uint8)

    return kernel


def _build_randaugment_call(ops, N, C, H, W):
    """Builds the fused pallas_call for a static op chain on (N*C, H*W) uint8 rows."""
    HW = H * W
    ipb = _choose_images_per_block(N, C, HW)
    rows_pb = ipb * C
    eq_chunk = _pick_eq_chunk(HW)

    aux_arrays = []
    op_plan = []
    for op_name, magnitude in ops:
        if op_name in _GEOM_OPS:
            aux_np, uniq = _geom_tables(op_name, magnitude, H, W)
            op_plan.append(("geom", (len(aux_arrays), tuple(uniq))))
            aux_arrays.append(jnp.asarray(aux_np))               # (1, HW) f32
        elif op_name == "Sharpness":
            op_plan.append(("sharp", (len(aux_arrays), magnitude)))
            aux_arrays.append(jnp.asarray(_interior_mask(H, W)))  # (1, HW) f32
        else:
            op_plan.append(("photo", (op_name, magnitude)))

    kernel = _make_fused_kernel(tuple(op_plan), ipb, C, H, W, eq_chunk)

    in_specs = [pl.BlockSpec((rows_pb, HW), lambda n: (n, 0))]
    # batch-invariant tables: constant block index -> fetched once, not per grid step
    in_specs += [pl.BlockSpec((1, HW), lambda n: (0, 0)) for _ in aux_arrays]

    fn = pl.pallas_call(
        kernel,
        out_shape=jax.ShapeDtypeStruct((N * C, HW), jnp.uint8),
        grid=(N // ipb,),
        in_specs=in_specs,
        out_specs=pl.BlockSpec((rows_pb, HW), lambda n: (n, 0)),
        compiler_params=pltpu.CompilerParams(
            dimension_semantics=("parallel",),
            vmem_limit_bytes=_vmem_limit_bytes(rows_pb, HW, eq_chunk, len(aux_arrays)),
        ),
    )
    return fn, aux_arrays


_CALL_CACHE = {}


def _get_randaugment_call(ops, N, C, H, W):
    key = (tuple(ops), N, C, H, W)
    if key not in _CALL_CACHE:
        _CALL_CACHE[key] = _build_randaugment_call(tuple(ops), N, C, H, W)
    return _CALL_CACHE[key]


# ----------------------------------------------------------------------------
# RandAugment module (JAX / Pallas)
# ----------------------------------------------------------------------------
class RandAugmentPallas:
    """JAX/Pallas port of torchvision RandAugment forward (uint8 NCHW tensors)."""

    def __init__(self, num_ops=2, magnitude=9, num_magnitude_bins=31,
                 fill=None, seed=0):
        self.num_ops = num_ops
        self.magnitude = magnitude
        self.num_magnitude_bins = num_magnitude_bins
        self.fill = fill  # TODO(synk): non-zero fill values (fill=None -> 0 implemented)
        # Deterministic stand-in for torch's advancing global RNG; persists across calls
        # so successive batches get fresh op chains.
        self._rng = np.random.default_rng(seed)

    def _augmentation_space(self, num_bins, image_size):
        # image_size = [width, height] (as F.get_image_size returns)
        return {
            "Identity": (np.array(0.0), False),
            "ShearX": (np.linspace(0.0, 0.3, num_bins), True),
            "ShearY": (np.linspace(0.0, 0.3, num_bins), True),
            "TranslateX": (np.linspace(0.0, 150.0 / 331.0 * image_size[0], num_bins), True),
            "TranslateY": (np.linspace(0.0, 150.0 / 331.0 * image_size[1], num_bins), True),
            "Rotate": (np.linspace(0.0, 30.0, num_bins), True),
            "Brightness": (np.linspace(0.0, 0.9, num_bins), True),
            "Color": (np.linspace(0.0, 0.9, num_bins), True),
            "Contrast": (np.linspace(0.0, 0.9, num_bins), True),
            "Sharpness": (np.linspace(0.0, 0.9, num_bins), True),
            "Posterize": (8 - np.round(np.arange(num_bins) / ((num_bins - 1) / 4)).astype(np.int64), False),
            "Solarize": (np.linspace(255.0, 0.0, num_bins), False),
            "AutoContrast": (np.array(0.0), False),
            "Equalize": (np.array(0.0), False),
        }

    def __call__(self, img):
        # img: uint8 (N, C, H, W); the sampled chain is applied to the whole batch,
        # matching the torch module's tensor semantics.
        img = jnp.asarray(img, dtype=jnp.uint8)
        N, C, H, W = img.shape

        applied = []
        for _ in range(self.num_ops):
            space = self._augmentation_space(self.num_magnitude_bins, [W, H])
            names = list(space.keys())
            op_index = int(self._rng.integers(0, len(names)))
            op_name = names[op_index]
            magnitudes, signed = space[op_name]
            magnitude = float(magnitudes[self.magnitude]) if magnitudes.ndim > 0 else 0.0
            if signed and int(self._rng.integers(0, 2)):
                magnitude *= -1.0
            applied.append((op_name, magnitude))

        fn, aux_arrays = _get_randaugment_call(tuple(applied), N, C, H, W)
        out = fn(img.reshape(N * C, H * W), *aux_arrays)
        return out.reshape(N, C, H, W), applied


if __name__ == "__main__":
    key = jax.random.PRNGKey(0)
    img = jax.random.randint(key, (2, 3, 16, 16), 0, 256, dtype=jnp.int32).astype(jnp.uint8)

    aug = RandAugmentPallas(num_ops=2, magnitude=9, num_magnitude_bins=31, seed=0)
    out, applied = aug(img)
    out = jax.block_until_ready(out)

    assert out.shape == img.shape, (out.shape, img.shape)
    assert out.dtype == jnp.uint8
    print("KERNEL_OK")
</pallas_src>

<mosaic_0001>
module attributes {stable_mosaic.version = 11 : i64} {
  func.func @kernel(%arg0: i32, %arg1: memref<6x256xi8, #tpu.memory_space<vmem>>, %arg2: memref<6x256xi8, #tpu.memory_space<vmem>>) attributes {dimension_semantics = [#tpu.dimension_semantics<parallel>], iteration_bounds = array<i64: 1>, scalar_prefetch = 0 : i64, scratch_operands = 0 : i64, tpu.core_type = #tpu.core_type<tc>, window_params = [{transform_indices = @transform_0, window_bounds = array<i64: 6, 256>}, {transform_indices = @transform_1, window_bounds = array<i64: 6, 256>}]} {
    %c0 = arith.constant 0 : index
    %c0_0 = arith.constant 0 : index
    %0 = vector.load %arg1[%c0, %c0_0] : memref<6x256xi8, #tpu.memory_space<vmem>>, vector<6x256xi8>
    %1 = arith.extui %0 : vector<6x256xi8> to vector<6x256xi32>
    %2 = arith.sitofp %1 : vector<6x256xi32> to vector<6x256xf32>
    %cst = arith.constant 1.785000e+02 : f32
    %3 = vector.broadcast %cst : f32 to vector<6x256xf32>
    %4 = arith.cmpf oge, %2, %3 : vector<6x256xf32>
    %cst_1 = arith.constant 2.550000e+02 : f32
    %5 = vector.broadcast %cst_1 : f32 to vector<6x256xf32>
    %6 = arith.subf %5, %2 : vector<6x256xf32>
    %7 = arith.select %4, %6, %2 : vector<6x256xi1>, vector<6x256xf32>
    %8 = vector.extract_strided_slice %7 {offsets = [0, 0], sizes = [3, 256], strides = [1, 1]} : vector<6x256xf32> to vector<3x256xf32>
    %9 = vector.extract_strided_slice %8 {offsets = [0, 0], sizes = [1, 256], strides = [1, 1]} : vector<3x256xf32> to vector<1x256xf32>
    %cst_2 = arith.constant 2.989000e-01 : f32
    %10 = vector.broadcast %cst_2 : f32 to vector<1x256xf32>
    %11 = arith.mulf %10, %9 : vector<1x256xf32>
    %12 = vector.extract_strided_slice %8 {offsets = [1, 0], sizes = [1, 256], strides = [1, 1]} : vector<3x256xf32> to vector<1x256xf32>
    %cst_3 = arith.constant 5.870000e-01 : f32
    %13 = vector.broadcast %cst_3 : f32 to vector<1x256xf32>
    %14 = arith.mulf %13, %12 : vector<1x256xf32>
    %15 = arith.addf %11, %14 : vector<1x256xf32>
    %16 = vector.extract_strided_slice %8 {offsets = [2, 0], sizes = [1, 256], strides = [1, 1]} : vector<3x256xf32> to vector<1x256xf32>
    %cst_4 = arith.constant 1.140000e-01 : f32
    %17 = vector.broadcast %cst_4 : f32 to vector<1x256xf32>
    %18 = arith.mulf %17, %16 : vector<1x256xf32>
    %19 = arith.addf %15, %18 : vector<1x256xf32>
    %cst_5 = arith.constant 0.000000e+00 : f32
    %cst_6 = arith.constant 2.550000e+02 : f32
    %20 = vector.broadcast %cst_5 : f32 to vector<1x256xf32>
    %21 = arith.maximumf %20, %19 : vector<1x256xf32>
    %22 = vector.broadcast %cst_6 : f32 to vector<1x256xf32>
    %23 = arith.minimumf %22, %21 : vector<1x256xf32>
    %24 = math.floor %23 : vector<1x256xf32>
    %cst_7 = arith.constant dense<0.000000e+00> : vector<1xf32>
    %25 = vector.multi_reduction <add>, %24, %cst_7 [1] : vector<1x256xf32> to vector<1xf32>
    %26 = vector.shape_cast %25 : vector<1xf32> to vector<1x1xf32>
    %cst_8 = arith.constant dense<0.000000e+00> : vector<1xf32>
    %27 = vector.multi_reduction <add>, %26, %cst_8 [0] : vector<1x1xf32> to vector<1xf32>
    %28 = vector.shape_cast %27 : vector<1xf32> to vector<1x1xf32>
    %cst_9 = arith.constant 2.560000e+02 : f32
    %29 = vector.broadcast %cst_9 : f32 to vector<1x1xf32>
    %30 = arith.divf %28, %29 : vector<1x1xf32>
    %cst_10 = arith.constant 7.300000e-01 : f32
    %31 = vector.broadcast %cst_10 : f32 to vector<3x256xf32>
    %32 = arith.mulf %31, %8 : vector<3x256xf32>
    %cst_11 = arith.constant 2.700000e-01 : f32
    %33 = vector.broadcast %cst_11 : f32 to vector<1x1xf32>
    %34 = arith.mulf %33, %30 : vector<1x1xf32>
    %35 = vector.broadcast %34 : vector<1x1xf32> to vector<3x256xf32>
    %36 = arith.addf %32, %35 : vector<3x256xf32>
    %cst_12 = arith.constant 0.000000e+00 : f32
    %cst_13 = arith.constant 2.550000e+02 : f32
    %37 = vector.broadcast %cst_12 : f32 to vector<3x256xf32>
    %38 = arith.maximumf %37, %36 : vector<3x256xf32>
    %39 = vector.broadcast %cst_13 : f32 to vector<3x256xf32>
    %40 = arith.minimumf %39, %38 : vector<3x256xf32>
    %41 = math.floor %40 : vector<3x256xf32>
    %42 = vector.extract_strided_slice %7 {offsets = [3, 0], sizes = [3, 256], strides = [1, 1]} : vector<6x256xf32> to vector<3x256xf32>
    %43 = vector.extract_strided_slice %42 {offsets = [0, 0], sizes = [1, 256], strides = [1, 1]} : vector<3x256xf32> to vector<1x256xf32>
    %cst_14 = arith.constant 2.989000e-01 : f32
    %44 = vector.broadcast %cst_14 : f32 to vector<1x256xf32>
    %45 = arith.mulf %44, %43 : vector<1x256xf32>
    %46 = vector.extract_strided_slice %42 {offsets = [1, 0], sizes = [1, 256], strides = [1, 1]} : vector<3x256xf32> to vector<1x256xf32>
    %cst_15 = arith.constant 5.870000e-01 : f32
    %47 = vector.broadcast %cst_15 : f32 to vector<1x256xf32>
    %48 = arith.mulf %47, %46 : vector<1x256xf32>
    %49 = arith.addf %45, %48 : vector<1x256xf32>
    %50 = vector.extract_strided_slice %42 {offsets = [2, 0], sizes = [1, 256], strides = [1, 1]} : vector<3x256xf32> to vector<1x256xf32>
    %cst_16 = arith.constant 1.140000e-01 : f32
    %51 = vector.broadcast %cst_16 : f32 to vector<1x256xf32>
    %52 = arith.mulf %51, %50 : vector<1x256xf32>
    %53 = arith.addf %49, %52 : vector<1x256xf32>
    %cst_17 = arith.constant 0.000000e+00 : f32
    %cst_18 = arith.constant 2.550000e+02 : f32
    %54 = vector.broadcast %cst_17 : f32 to vector<1x256xf32>
    %55 = arith.maximumf %54, %53 : vector<1x256xf32>
    %56 = vector.broadcast %cst_18 : f32 to vector<1x256xf32>
    %57 = arith.minimumf %56, %55 : vector<1x256xf32>
    %58 = math.floor %57 : vector<1x256xf32>
    %cst_19 = arith.constant dense<0.000000e+00> : vector<1xf32>
    %59 = vector.multi_reduction <add>, %58, %cst_19 [1] : vector<1x256xf32> to vector<1xf32>
    %60 = vector.shape_cast %59 : vector<1xf32> to vector<1x1xf32>
    %cst_20 = arith.constant dense<0.000000e+00> : vector<1xf32>
    %61 = vector.multi_reduction <add>, %60, %cst_20 [0] : vector<1x1xf32> to vector<1xf32>
    %62 = vector.shape_cast %61 : vector<1xf32> to vector<1x1xf32>
    %cst_21 = arith.constant 2.560000e+02 : f32
    %63 = vector.broadcast %cst_21 : f32 to vector<1x1xf32>
    %64 = arith.divf %62, %63 : vector<1x1xf32>
    %cst_22 = arith.constant 7.300000e-01 : f32
    %65 = vector.broadcast %cst_22 : f32 to vector<3x256xf32>
    %66 = arith.mulf %65, %42 : vector<3x256xf32>
    %cst_23 = arith.constant 2.700000e-01 : f32
    %67 = vector.broadcast %cst_23 : f32 to vector<1x1xf32>
    %68 = arith.mulf %67, %64 : vector<1x1xf32>
    %69 = vector.broadcast %68 : vector<1x1xf32> to vector<3x256xf32>
    %70 = arith.addf %66, %69 : vector<3x256xf32>
    %cst_24 = arith.constant 0.000000e+00 : f32
    %cst_25 = arith.constant 2.550000e+02 : f32
    %71 = vector.broadcast %cst_24 : f32 to vector<3x256xf32>
    %72 = arith.maximumf %71, %70 : vector<3x256xf32>
    %73 = vector.broadcast %cst_25 : f32 to vector<3x256xf32>
    %74 = arith.minimumf %73, %72 : vector<3x256xf32>
    %75 = math.floor %74 : vector<3x256xf32>
    %76 = tpu.concatenate %41, %75 in 0 : vector<3x256xf32>, vector<3x256xf32> -> vector<6x256xf32>
    %cst_26 = arith.constant 0.000000e+00 : f32
    %cst_27 = arith.constant 2.550000e+02 : f32
    %77 = vector.broadcast %cst_26 : f32 to vector<6x256xf32>
    %78 = arith.maximumf %77, %76 : vector<6x256xf32>
    %79 = vector.broadcast %cst_27 : f32 to vector<6x256xf32>
    %80 = arith.minimumf %79, %78 : vector<6x256xf32>
    %81 = arith.fptosi %80 : vector<6x256xf32> to vector<6x256xi32>
    %82 = arith.trunci %81 : vector<6x256xi32> to vector<6x256xi8>
    %c0_28 = arith.constant 0 : index
    %c0_29 = arith.constant 0 : index
    %83 = vector.load %arg2[%c0_28, %c0_29] : memref<6x256xi8, #tpu.memory_space<vmem>>, vector<6x256xi8>
    tpu.vector_store %arg2[%c0_28, %c0_29], %82 {strides = array<i32>} : memref<6x256xi8, #tpu.memory_space<vmem>>, vector<6x256xi8>,
    return
  }
  func.func @transform_0(%arg0: i32) -> (i32, i32) {
    %c0_i32 = arith.constant 0 : i32
    %c0_i32_0 = arith.constant 0 : i32
    return %arg0, %c0_i32 : i32, i32
  }
  func.func @transform_1(%arg0: i32) -> (i32, i32) {
    %c0_i32 = arith.constant 0 : i32
    %c0_i32_0 = arith.constant 0 : i32
    return %arg0, %c0_i32 : i32, i32
  }
}

</mosaic_0001>

<llo_original>
// kernel: tpu_custom_call.1
$region0: #{tpu_custom_call.1}
  #allocation0 [shape = 'u32[]', space=smem, size = 0x4, offset = 0x4, fixed_abs, tag = 'smem constant byte address 0x4 - core index']
  #allocation1 [shape = 'u32[72,128]{1,0:T(1,128)}', space=vmem, size = 0x9000, scoped, tag = 'internal scratch']
  %s0 = inlined_call_operand.hbm [shape: u8[6,256], index: 0, kind: input, shape index: {}]
  %s1 = inlined_call_operand.hbm [shape: u8[6,256], index: 1, kind: output, shape index: {}]
  %s2 = sld [smem:[#allocation0]]
  $region18: #{tpu_custom_call.1} parent=0
    _
  %s4 = ssub.s32 1, %s2
  %s5 = scalar_select 0, %s4, %s2
  $region1: #{tpu_custom_call.1} parent=0
    #allocation2 [shape = 'u8[2048]{0}', space=vmem, size = 0x800, scoped, tag = 'input window, operand 0, single buffered']
    #allocation3 [shape = 's32[1]{0}', space=sflag, size = 0x4, scoped, tag = 'scoped memory for tpu_custom_call.1']
    #allocation4 [shape = 's32[1]{0}', space=sflag, size = 0x4, scoped, tag = 'scoped memory for tpu_custom_call.1']
    #allocation5 [shape = 'u8[2048]{0}', space=vmem, size = 0x800, scoped, tag = 'output window, operand 0, single buffered']
    %6 = vsyncpa [#allocation3], 0
    %7 = vsyncpa [#allocation4], 0
    // Predicated region
    $region2: #{tpu_custom_call.1} parent=1 // pred_check
      _
    $region3: #{tpu_custom_call.1} parent=1 // pred_check_branch
      %9 = sbr.rel (0) target = $region5
    $region4: #{tpu_custom_call.1} parent=1 // pred_region
      %11 = vsyncadd [#allocation3], 0
      %s13 = sshll.u32 %s0, 4
      %s14 = int_to_ptr.hbm [resolvable:$true] %s13
      %s15 = sshll.u32 [#allocation2], 4
      %s16 = int_to_ptr.vmem [resolvable:$true] %s15
      %18 = dma.hbm_to_vmem [thread:$0]  %s14, 64, %s16, [#allocation3]
    $region5: #{tpu_custom_call.1} parent=1 // pred_fallthru
      _
    // Predicated region
    $region6: #{tpu_custom_call.1} parent=1 // pred_check
      _
    $region7: #{tpu_custom_call.1} parent=1 // pred_check_branch
      %20 = sbr.rel (0) target = $region9
    $region8: #{tpu_custom_call.1} parent=1 // pred_region
      %22 = dma.done [#allocation3], 64
    $region9: #{tpu_custom_call.1} parent=1 // pred_fallthru
      _
    %v23 = vld [vmem:[#allocation2] sm:$0xf]
    %v24 = vunpack.c.0.s8 %v23
    %v25 = vunpack.c.1.s8 %v23
    %v26 = vand.u32 %v24, 255
    %v27 = vand.u32 %v25, 255
    %v28 = vcvt.s32.f32 %v26
    %v29 = vcvt.s32.f32 %v27
    %vm30 = vcmp.ge.f32.partialorder %v28, 178.5
    %vm31 = vcmp.ge.f32.partialorder %v29, 178.5
    %v32 = vsub.f32 255.0, %v28
    %v33 = vsub.f32 255.0, %v29
    %v34 = vsel %vm30, %v32, %v28
    %v35 = vsel %vm31, %v33, %v29
    %v36 = vmul.f32 %v34, 0.2989
    %v37 = vmul.f32 %v35, 0.2989
    %v38 = vmul.f32 %v34, 0.587
    %v39 = vmul.f32 %v35, 0.587
    %v42 = vrot.slane %v38, 1
    %v43 = vrot.slane %v39, 1
    %v46 = vadd.f32 %v36, %v42
    %v47 = vadd.f32 %v37, %v43
    %v48 = vmul.f32 %v34, 0.114
    %v49 = vmul.f32 %v35, 0.114
    %v52 = vrot.slane %v48, 2
    %v53 = vrot.slane %v49, 2
    %v56 = vadd.f32 %v46, %v52
    %v57 = vadd.f32 %v47, %v53
    %v58 = vmax.f32 %v56, 0.0
    %v59 = vmax.f32 %v57, 0.0
    %v60 = vmin.f32 %v58, 255.0
    %v61 = vmin.f32 %v59, 255.0
    %v62 = vfloor.f32 %v60
    %v63 = vfloor.f32 %v61
    %vm64 = vcmask 1040384
    %v65 = vsel %vm64, %v62, 0.0
    %v66 = vsel %vm64, %v63, 0.0
    %v67 = vadd.f32 %v65, %v66
    %68 = vadd.xlane.f32.xlu0 %v67
    %v69 = vpop.xlane.xlu0 %68
    %v70 = vadd.f32 %v69, 0.0
    %v71 = vrcp.pop 256.0
    %v72 = vmul.f32 256.0, %v71
    %v73 = vsub.f32 1.0, %v72
    %v74 = vmul.f32 %v71, %v73
    %v75 = vadd.f32 %v71, %v74
    %vm76 = vweird.f32 %v71
    %v77 = vsel %vm76, %v71, %v75
    %v78 = vmul.f32 %v70, %v77
    %v79 = vmul.f32 %v34, 0.73
    %v80 = vmul.f32 %v35, 0.73
    %v81 = vmul.f32 %v78, 0.27
    %v82 = vperm.slane %v81, 0
    %v83 = vadd.f32 %v79, %v82
    %v84 = vadd.f32 %v80, %v82
    %v85 = vmax.f32 %v83, 0.0
    %v86 = vmax.f32 %v84, 0.0
    %v87 = vmin.f32 %v85, 255.0
    %v88 = vmin.f32 %v86, 255.0
    %v89 = vfloor.f32 %v87
    %v90 = vfloor.f32 %v88
    %vm91 = vcmask 1043459
    %v92 = vsel %vm91, %v62, 0.0
    %v93 = vsel %vm91, %v63, 0.0
    %v94 = vadd.f32 %v92, %v93
    %95 = vadd.xlane.f32.xlu0 %v94
    %v96 = vpop.xlane.xlu0 %95
    %v97 = vadd.f32 %v96, 0.0
    %v98 = vmul.f32 %v97, %v77
    %v99 = vmul.f32 %v98, 0.27
    %v100 = vperm.slane %v99, 3
    %v101 = vadd.f32 %v79, %v100
    %v102 = vadd.f32 %v80, %v100
    %v103 = vmax.f32 %v101, 0.0
    %v104 = vmax.f32 %v102, 0.0
    %v105 = vmin.f32 %v103, 255.0
    %v106 = vmin.f32 %v104, 255.0
    %v107 = vfloor.f32 %v105
    %v108 = vfloor.f32 %v106
    %vm109 = vcmask 1042432
    %v110 = vsel %vm109, %v89, %v107
    %v111 = vsel %vm109, %v90, %v108
    %v112 = vmax.f32 %v110, 0.0
    %v113 = vmax.f32 %v111, 0.0
    %v114 = vmin.f32 %v112, 255.0
    %v115 = vmin.f32 %v113, 255.0
    %v116 = vcvt.f32.s32.to.zero.pseudo %v114
    %v117 = vcvt.f32.s32.to.zero.pseudo %v115
    %v118 = vpack.c.b16 %v117, %v116
    %v119 = vpack.c.b8 %v118, %v118
    %vm120 = vcmask 1041408
    %vm121 = vsmask.f32 1280
    %vm122 = vmand %vm120, %vm121
    %vm123 = vcmask 1043458
    %vm124 = vsmask.f32 3328
    %vm125 = vmand %vm123, %vm124
    %vm126 = vmor %vm125, %vm122
    %v127 = vld [vmem:[#allocation5] sm:$0xf]
    %v128 = vsel %vm126, %v119, %v127
    %129 = vst [vmem:[#allocation5] sm:$0xf] %v128
    // Predicated region
    $region10: #{tpu_custom_call.1} parent=1 // pred_check
      _
    $region11: #{tpu_custom_call.1} parent=1 // pred_check_branch
      %131 = sbr.rel (0) target = $region13
    $region12: #{tpu_custom_call.1} parent=1 // pred_region
      %133 = vsyncadd [#allocation4], 0
      %s135 = sshll.u32 [#allocation5], 4
      %s136 = int_to_ptr.vmem [resolvable:$true] %s135
      %s137 = sshll.u32 %s1, 4
      %s138 = int_to_ptr.hbm [resolvable:$true] %s137
      %140 = dma.vmem_to_hbm [thread:$0]  %s136, 64, %s138, [#allocation4]
    $region13: #{tpu_custom_call.1} parent=1 // pred_fallthru
      _
    // Predicated region
    $region14: #{tpu_custom_call.1} parent=1 // pred_check
      _
    $region15: #{tpu_custom_call.1} parent=1 // pred_check_branch
      %142 = sbr.rel (0) target = $region17
    $region16: #{tpu_custom_call.1} parent=1 // pred_region
      %144 = dma.done [#allocation4], 64
    $region17: #{tpu_custom_call.1} parent=1 // pred_fallthru
      _
    %145 = vsyncpa [#allocation3], 1
    %146 = vsyncpa [#allocation4], 1

</llo_original>
